<compile_context>
chip_gen: v5e
topology: v5e:2x2
jax: 0.10.0
libtpu: 0.0.40
codegen_flags: <defaults>
</compile_context>

<pallas_src>
import functools

import jax
import jax.numpy as jnp
from jax.experimental import pallas as pl
from jax.experimental.pallas import tpu as pltpu


LANE = 128                               # lane width: last dims multiples of this
VMEM_LIMIT = 48 * 1024 * 1024            # <= v7x's 64 MiB physical; fine on v5e/v6e
VMEM_BUDGET = 40 * 1024 * 1024           # working-set target for tile shrinking
RESIDENT_HSRC_BYTES = 4 * 1024 * 1024    # keep h_src fully in VMEM below this


def _round_up(x, m):
    return ((x + m - 1) // m) * m


def _pick_tile(n_p, cap, min_tiles=1):
    """Largest multiple of 128 that divides n_p, is <= cap, gives >= min_tiles tiles."""
    best = LANE
    t = LANE
    while t <= min(cap, n_p):
        if n_p % t == 0 and n_p // t >= min_tiles:
            best = t
        t += LANE
    return best


# ----------------------------- Pallas kernels -----------------------------

def _fc_init_relu_kernel(x_ref, w_ref, b_ref, o_ref):
    # h = relu(x @ W + b)   (== self.activation(self.fc_init(features)))
    h = jnp.dot(x_ref[...], w_ref[...], preferred_element_type=jnp.float32)
    o_ref[...] = jnp.maximum(h + b_ref[...], 0.0).astype(o_ref.dtype)


def _sage_conv_kernel(adj_ref, h_src_ref, h_dst_ref, w_self_ref, w_neigh_ref,
                      b_ref, o_ref, deg_ref, *, apply_activation, tk,
                      src_resident):
    # grid = (dst tiles ["parallel"], src tiles ["arbitrary" / reduction])
    k = pl.program_id(1)

    @pl.when(k == 0)
    def _init():
        o_ref[...] = jnp.zeros_like(o_ref)        # f32 accumulator == output tile
        deg_ref[...] = jnp.zeros_like(deg_ref)    # per-dst-row in-degree

    adj = adj_ref[...]                            # raw 0/1 adjacency tile (bf16)
    if src_resident:                              # whole h_src lives in VMEM
        start = pl.multiple_of(k * tk, LANE)
        h_src = h_src_ref[pl.ds(start, tk), :]
    else:                                         # streamed (tk, hp) tile
        h_src = h_src_ref[...]

    # Neighbor-sum accumulation on the MXU; degree accumulation rides the XLU.
    o_ref[...] += jnp.dot(adj, h_src, preferred_element_type=jnp.float32)
    deg_ref[...] += jnp.sum(adj.astype(jnp.float32), axis=1, keepdims=True)

    @pl.when(k == pl.num_programs(1) - 1)
    def _finalize():
        # Mean aggregation: 1/deg on the EUP; max(deg,1) keeps zero-in-degree
        # rows at agg == 0.
        inv_deg = pl.reciprocal(jnp.maximum(deg_ref[...], 1.0), approx=True)
        agg = (o_ref[...] * inv_deg).astype(h_dst_ref.dtype)
        # combine_type='sum': fc_self(h_dst) + fc_neigh(mean_agg), fused bias.
        out = (jnp.dot(h_dst_ref[...], w_self_ref[...],
                       preferred_element_type=jnp.float32)
               + jnp.dot(agg, w_neigh_ref[...],
                         preferred_element_type=jnp.float32)
               + b_ref[...])
        if apply_activation:                      # act_flag = (i != depth - 1)
            out = jnp.maximum(out, 0.0)
        o_ref[...] = out.astype(o_ref.dtype)


# ------------------------------ JAX wrappers -------------------------------

def fc_init_relu(x, w, b, *, rows_out=None, tm_cap=512):
    """relu(x @ w + b), lane-dense: bf16 streams, in_dim & hidden padded to 128.

    Returns activations in padded (rows_out, hp) bf16 form so downstream kernels
    consume them without a slice/re-pad HBM round trip.  Padded rows hold
    relu(b); harmless because they only ever meet zero adjacency columns.
    """
    n, in_dim = x.shape
    h_dim = w.shape[1]
    hp = _round_up(h_dim, LANE)
    in_p = _round_up(in_dim, LANE)
    n_p = _round_up(n, LANE) if rows_out is None else rows_out
    assert n_p >= n and n_p % LANE == 0
    tm = _pick_tile(n_p, tm_cap, min_tiles=2)

    x_p = jnp.zeros((n_p, in_p), jnp.bfloat16).at[:n, :in_dim].set(
        x.astype(jnp.bfloat16))
    w_p = jnp.zeros((in_p, hp), jnp.bfloat16).at[:in_dim, :h_dim].set(
        w.astype(jnp.bfloat16))
    b_p = jnp.zeros((1, hp), jnp.float32).at[0, :h_dim].set(
        b.astype(jnp.float32))

    return pl.pallas_call(
        _fc_init_relu_kernel,
        grid=(n_p // tm,),
        in_specs=[
            pl.BlockSpec((tm, in_p), lambda i: (i, 0)),   # x row tile
            pl.BlockSpec((in_p, hp), lambda i: (0, 0)),   # full weight
            pl.BlockSpec((1, hp), lambda i: (0, 0)),      # bias
        ],
        out_specs=pl.BlockSpec((tm, hp), lambda i: (i, 0)),
        out_shape=jax.ShapeDtypeStruct((n_p, hp), jnp.bfloat16),
        compiler_params=pltpu.CompilerParams(
            dimension_semantics=("parallel",),
            vmem_limit_bytes=VMEM_LIMIT),
        cost_estimate=pl.CostEstimate(
            flops=2 * n_p * in_p * hp,
            transcendentals=0,
            bytes_accessed=(n_p * in_p + in_p * hp + n_p * hp) * 2 + hp * 4),
    )(x_p, w_p, b_p)


def sage_conv(adj, h, w_self, b_self, w_neigh, b_neigh, act_flag,
              *, tm_cap=1024, tk_cap=2048):
    """SAGEConv(mean aggregator, combine='sum'), dense adjacency, tiled.

    `adj` is the raw (n_dst, n_src) 0/1 block adjacency; `h` holds the source
    activations and may already be padded lane-dense bf16 (reused unchanged in
    that case).  Returns the padded (n_dst_p, hp) f32 output; the caller slices
    to (n_dst, hidden) once at the very end.
    """
    n_dst, n_src = adj.shape
    d_in, d_out = w_self.shape
    assert w_neigh.shape == (d_in, d_out) and d_in == d_out, \
        "GNN_1l uses a square hidden->hidden SAGEConv"
    hp = _round_up(d_out, LANE)

    n_dst_p = _round_up(n_dst, LANE)
    n_src_p = _round_up(n_src, LANE)
    rows_p = max(n_src_p, n_dst_p)

    # h_src fully VMEM-resident (fetched once) when small enough, else streamed.
    src_resident = n_src_p * hp * 2 <= RESIDENT_HSRC_BYTES

    # VMEM-budget-aware tile caps (one config fits v7x's 64 MiB and v5e/v6e).
    def step_bytes(tm, tk):
        hsrc = 2 * rows_p * hp * 2 if src_resident else 2 * tk * hp * 2
        return (2 * tm * tk * 2        # adj tiles (double-buffered bf16)
                + hsrc                 # h_src
                + 2 * tm * hp * 2      # h_dst tiles
                + 2 * 2 * hp * hp * 2  # W_self + W_neigh
                + 2 * tm * hp * 4      # f32 output/accumulator tile
                + tm * 4)              # deg scratch

    while (step_bytes(min(tm_cap, n_dst_p), min(tk_cap, n_src_p)) > VMEM_BUDGET
           and (tk_cap > LANE or tm_cap > LANE)):
        if tk_cap > LANE:
            tk_cap //= 2
        else:
            tm_cap //= 2

    tm = _pick_tile(n_dst_p, tm_cap, min_tiles=2)   # >=2 dst tiles -> both v7x TCs
    tk = _pick_tile(n_src_p, tk_cap, min_tiles=1)

    # Raw 0/1 adjacency, bf16, zero-padded: the ONLY wrapper pass over the N^2
    # stream (mean normalization happens inside the kernel).
    if adj.shape == (n_dst_p, n_src_p) and adj.dtype == jnp.bfloat16:
        adj_p = adj
    else:
        adj_p = jnp.zeros((n_dst_p, n_src_p), jnp.bfloat16).at[
            :n_dst, :n_src].set(adj.astype(jnp.bfloat16))

    # Activations: reuse the padded bf16 form if the caller already keeps it.
    if h.shape == (rows_p, hp) and h.dtype == jnp.bfloat16:
        h_p = h
    else:
        r = min(h.shape[0], rows_p)
        c = min(h.shape[1], hp)
        h_p = jnp.zeros((rows_p, hp), jnp.bfloat16).at[:r, :c].set(
            h[:r, :c].astype(jnp.bfloat16))

    w_self_p = jnp.zeros((hp, hp), jnp.bfloat16).at[:d_in, :d_out].set(
        w_self.astype(jnp.bfloat16))
    w_neigh_p = jnp.zeros((hp, hp), jnp.bfloat16).at[:d_in, :d_out].set(
        w_neigh.astype(jnp.bfloat16))
    b_cat = jnp.zeros((1, hp), jnp.float32).at[0, :d_out].set(
        (b_self + b_neigh).astype(jnp.float32))

    if src_resident:
        h_src_spec = pl.BlockSpec((rows_p, hp), lambda i, k: (0, 0))
    else:
        h_src_spec = pl.BlockSpec((tk, hp), lambda i, k: (k, 0))

    kernel = functools.partial(_sage_conv_kernel,
                               apply_activation=bool(act_flag),
                               tk=tk, src_resident=src_resident)

    h_src_reads = (rows_p * hp * 2 if src_resident
                   else (n_dst_p // tm) * n_src_p * hp * 2)
    out = pl.pallas_call(
        kernel,
        grid=(n_dst_p // tm, n_src_p // tk),
        in_specs=[
            pl.BlockSpec((tm, tk), lambda i, k: (i, k)),    # adj tile
            h_src_spec,                                     # h_src (tile or resident)
            pl.BlockSpec((tm, hp), lambda i, k: (i, 0)),    # h_dst tile (same array)
            pl.BlockSpec((hp, hp), lambda i, k: (0, 0)),    # W_self
            pl.BlockSpec((hp, hp), lambda i, k: (0, 0)),    # W_neigh
            pl.BlockSpec((1, hp), lambda i, k: (0, 0)),     # fused bias
        ],
        out_specs=pl.BlockSpec((tm, hp), lambda i, k: (i, 0)),
        out_shape=jax.ShapeDtypeStruct((n_dst_p, hp), jnp.float32),
        scratch_shapes=[pltpu.VMEM((tm, 1), jnp.float32)],  # per-row degree
        compiler_params=pltpu.CompilerParams(
            dimension_semantics=("parallel", "arbitrary"),
            vmem_limit_bytes=VMEM_LIMIT),
        cost_estimate=pl.CostEstimate(
            flops=2 * n_dst_p * n_src_p * hp + 4 * n_dst_p * hp * hp,
            transcendentals=n_dst_p,
            bytes_accessed=(n_dst_p * n_src_p * 2        # adj
                            + h_src_reads                # h_src (incl. re-reads)
                            + n_dst_p * hp * 2           # h_dst
                            + 2 * hp * hp * 2 + hp * 4   # weights + bias
                            + n_dst_p * hp * 4)),        # output
    )(adj_p, h_p, h_p, w_self_p, w_neigh_p, b_cat)
    return out                       # padded (n_dst_p, hp) f32


def gnn_1l_forward(blocks, features, params):
    """Mirrors GNN_1l.forward(blocks, features) (inference; dropout == identity)."""
    depth = len(blocks)
    hidden = params["w_init"].shape[1]
    n_src0 = blocks[0].shape[1] if depth else features.shape[0]
    rows_p = _round_up(max(features.shape[0], n_src0), LANE)

    # h = self.activation(self.fc_init(features)), kept padded / bf16 / lane-dense.
    h = fc_init_relu(features, params["w_init"], params["b_init"],
                     rows_out=rows_p)

    for i, adj in enumerate(blocks):
        # TODO(synk): dropout (applied for i != 0) is identity at inference.
        act_flag = i != depth - 1
        h = sage_conv(adj, h,
                      params["w_self"], params["b_self"],
                      params["w_neigh"], params["b_neigh"], act_flag)

    # Slice the padding away once, at the very end (f32 matches the torch ref).
    n_out = blocks[-1].shape[0] if depth else features.shape[0]
    out = h[:n_out, :hidden].astype(jnp.float32)
    # torch's h.squeeze(1): drops axis 1 only if it has size 1
    if out.ndim > 1 and out.shape[1] == 1:
        out = jnp.squeeze(out, axis=1)
    return out


# ---------------------------------- main -----------------------------------

if __name__ == "__main__":
    key = jax.random.PRNGKey(0)
    k_feat, k_adj, k1, k2, k3, k4 = jax.random.split(key, 6)

    # small synthetic problem: 16 nodes, in_dim=8, hidden_dim=32, depth=1 block
    N, IN_DIM, HIDDEN = 16, 8, 32

    features = jax.random.normal(k_feat, (N, IN_DIM), dtype=jnp.float32)
    # dense adjacency for the single block (dst x src), with self-loops
    adj = (jax.random.uniform(k_adj, (N, N)) < 0.3).astype(jnp.float32)
    adj = jnp.maximum(adj, jnp.eye(N, dtype=jnp.float32))
    blocks = [adj]

    params = {
        # fc_init: Linear(in_dim, hidden_dim)  -> stored as (in_dim, hidden)
        "w_init": 0.1 * jax.random.normal(k1, (IN_DIM, HIDDEN), jnp.float32),
        "b_init": jnp.zeros((HIDDEN,), jnp.float32),
        # SAGEConv(hidden, hidden): fc_self and fc_neigh
        "w_self": 0.1 * jax.random.normal(k2, (HIDDEN, HIDDEN), jnp.float32),
        "b_self": 0.01 * jax.random.normal(k3, (HIDDEN,), jnp.float32),
        "w_neigh": 0.1 * jax.random.normal(k4, (HIDDEN, HIDDEN), jnp.float32),
        "b_neigh": jnp.zeros((HIDDEN,), jnp.float32),
    }

    out = gnn_1l_forward(blocks, features, params)
    jax.block_until_ready(out)
    assert out.shape == (N, HIDDEN) and out.dtype == jnp.float32

    # quick correctness check vs a pure-JAX f32 reference (bf16-level tolerance)
    h_ref = jax.nn.relu(features @ params["w_init"] + params["b_init"])
    deg = jnp.maximum(adj.sum(axis=1, keepdims=True), 1.0)
    agg_ref = (adj @ h_ref) / deg
    ref = (h_ref @ params["w_self"] + params["b_self"]
           + agg_ref @ params["w_neigh"] + params["b_neigh"])
    rel_err = jnp.max(jnp.abs(out - ref)) / (jnp.max(jnp.abs(ref)) + 1e-6)
    assert rel_err < 5e-2, f"relative error too large: {rel_err}"

    print("KERNEL_OK")
</pallas_src>

<mosaic_0001>
module attributes {stable_mosaic.version = 11 : i64} {
  func.func @_fc_init_relu_kernel(%arg0: i32, %arg1: memref<128x128xbf16, #tpu.memory_space<vmem>>, %arg2: memref<128x128xbf16, #tpu.memory_space<vmem>>, %arg3: memref<1x128xf32, #tpu.memory_space<vmem>>, %arg4: memref<128x128xbf16, #tpu.memory_space<vmem>>) attributes {dimension_semantics = [#tpu.dimension_semantics<parallel>], iteration_bounds = array<i64: 1>, scalar_prefetch = 0 : i64, scratch_operands = 0 : i64, tpu.core_type = #tpu.core_type<tc>, window_params = [{transform_indices = @transform_0, window_bounds = array<i64: 128, 128>}, {pipeline_mode = #tpu.pipeline_mode<synchronous>, transform_indices = @transform_1, window_bounds = array<i64: 128, 128>}, {pipeline_mode = #tpu.pipeline_mode<synchronous>, transform_indices = @transform_2, window_bounds = array<i64: 1, 128>}, {transform_indices = @transform_3, window_bounds = array<i64: 128, 128>}]} {
    %c0 = arith.constant 0 : index
    %c0_0 = arith.constant 0 : index
    %0 = vector.load %arg1[%c0, %c0_0] : memref<128x128xbf16, #tpu.memory_space<vmem>>, vector<128x128xbf16>
    %c0_1 = arith.constant 0 : index
    %c0_2 = arith.constant 0 : index
    %1 = vector.load %arg2[%c0_1, %c0_2] : memref<128x128xbf16, #tpu.memory_space<vmem>>, vector<128x128xbf16>
    %cst = arith.constant dense<0.000000e+00> : vector<128x128xf32>
    %2 = tpu.matmul %0, %1, %cst {dimension_numbers = #tpu.dot_dimension_numbers<[1], [0], [0], [1], [0, 0, 1, 1], [], []>} : vector<128x128xbf16>, vector<128x128xbf16>, vector<128x128xf32> -> vector<128x128xf32>
    %c0_3 = arith.constant 0 : index
    %c0_4 = arith.constant 0 : index
    %3 = vector.load %arg3[%c0_3, %c0_4] : memref<1x128xf32, #tpu.memory_space<vmem>>, vector<1x128xf32>
    %4 = vector.broadcast %3 : vector<1x128xf32> to vector<128x128xf32>
    %5 = arith.addf %2, %4 : vector<128x128xf32>
    %cst_5 = arith.constant 0.000000e+00 : f32
    %6 = vector.broadcast %cst_5 : f32 to vector<128x128xf32>
    %7 = arith.maximumf %5, %6 : vector<128x128xf32>
    %8 = arith.truncf %7 : vector<128x128xf32> to vector<128x128xbf16>
    %c0_6 = arith.constant 0 : index
    %c0_7 = arith.constant 0 : index
    %9 = vector.load %arg4[%c0_6, %c0_7] : memref<128x128xbf16, #tpu.memory_space<vmem>>, vector<128x128xbf16>
    tpu.vector_store %arg4[%c0_6, %c0_7], %8 {strides = array<i32>} : memref<128x128xbf16, #tpu.memory_space<vmem>>, vector<128x128xbf16>,
    return
  }
  func.func @transform_0(%arg0: i32) -> (i32, i32) {
    %c0_i32 = arith.constant 0 : i32
    %c0_i32_0 = arith.constant 0 : i32
    return %arg0, %c0_i32 : i32, i32
  }
  func.func @transform_1(%arg0: i32) -> (i32, i32) {
    %c0_i32 = arith.constant 0 : i32
    %c0_i32_0 = arith.constant 0 : i32
    %c0_i32_1 = arith.constant 0 : i32
    return %c0_i32, %c0_i32_0 : i32, i32
  }
  func.func @transform_2(%arg0: i32) -> (i32, i32) {
    %c0_i32 = arith.constant 0 : i32
    %c0_i32_0 = arith.constant 0 : i32
    %c0_i32_1 = arith.constant 0 : i32
    return %c0_i32, %c0_i32_0 : i32, i32
  }
  func.func @transform_3(%arg0: i32) -> (i32, i32) {
    %c0_i32 = arith.constant 0 : i32
    %c0_i32_0 = arith.constant 0 : i32
    return %arg0, %c0_i32 : i32, i32
  }
}

</mosaic_0001>

<llo_original>
// kernel: tpu_custom_call.1
$region0: #{tpu_custom_call.1}
  #allocation0 [shape = 'u32[]', space=smem, size = 0x4, offset = 0x4, fixed_abs, tag = 'smem constant byte address 0x4 - core index']
  #allocation1 [shape = 'u32[72,128]{1,0:T(1,128)}', space=vmem, size = 0x9000, scoped, tag = 'internal scratch']
  %s0 = inlined_call_operand.hbm [shape: bf16[128,128], index: 0, kind: input, shape index: {}]
  %s1 = inlined_call_operand.hbm [shape: bf16[128,128], index: 1, kind: input, shape index: {}]
  %s2 = inlined_call_operand.vmem [shape: f32[1,128], index: 2, kind: input, shape index: {}]
  %s3 = inlined_call_operand.hbm [shape: bf16[128,128], index: 3, kind: output, shape index: {}]
  %s4 = sld [smem:[#allocation0]]
  $region30: #{tpu_custom_call.1} parent=0
    _
  %s6 = ssub.s32 1, %s4
  %s7 = scalar_select 0, %s6, %s4
  $region1: #{tpu_custom_call.1} parent=0
    #allocation2 [shape = 'u8[32768]{0}', space=vmem, size = 0x8000, scoped, tag = 'input window, operand 0, single buffered']
    #allocation3 [shape = 's32[1]{0}', space=sflag, size = 0x4, scoped, tag = 'scoped memory for tpu_custom_call.1']
    #allocation4 [shape = 's32[1]{0}', space=sflag, size = 0x4, scoped, tag = 'scoped memory for tpu_custom_call.1']
    #allocation5 [shape = 'u8[32768]{0}', space=vmem, size = 0x8000, scoped, tag = 'input window, operand 1, single buffered']
    #allocation6 [shape = 's32[1]{0}', space=sflag, size = 0x4, scoped, tag = 'scoped memory for tpu_custom_call.1']
    #allocation7 [shape = 'u8[32768]{0}', space=vmem, size = 0x8000, scoped, tag = 'output window, operand 0, single buffered']
    %8 = vsyncpa [#allocation3], 0
    %9 = vsyncpa [#allocation6], 0
    %10 = vsyncpa [#allocation4], 0
    // Predicated region
    $region2: #{tpu_custom_call.1} parent=1 // pred_check
      _
    $region3: #{tpu_custom_call.1} parent=1 // pred_check_branch
      %12 = sbr.rel (0) target = $region5
    $region4: #{tpu_custom_call.1} parent=1 // pred_region
      %14 = vsyncadd [#allocation3], 0
      %s15 = sshll.u32 %s0, 4
      %s16 = int_to_ptr.hbm [resolvable:$true] %s15
      %s17 = sshll.u32 [#allocation2], 4
      %s18 = int_to_ptr.vmem [resolvable:$true] %s17
      %23 = dma.hbm_to_vmem [thread:$0]  %s16, 1024, %s18, [#allocation3], 64, 64, 4
    $region5: #{tpu_custom_call.1} parent=1 // pred_fallthru
      _
    // Predicated region
    $region6: #{tpu_custom_call.1} parent=1 // pred_check
      _
    $region7: #{tpu_custom_call.1} parent=1 // pred_check_branch
      %25 = sbr.rel (0) target = $region9
    $region8: #{tpu_custom_call.1} parent=1 // pred_region
      %27 = vsyncadd [#allocation6], 0
      %s28 = sshll.u32 %s1, 4
      %s29 = int_to_ptr.hbm [resolvable:$true] %s28
      %s30 = sshll.u32 [#allocation5], 4
      %s31 = int_to_ptr.vmem [resolvable:$true] %s30
      %36 = dma.hbm_to_vmem [thread:$0]  %s29, 1024, %s31, [#allocation6], 64, 64, 4
    $region9: #{tpu_custom_call.1} parent=1 // pred_fallthru
      _
    // Predicated region
    $region10: #{tpu_custom_call.1} parent=1 // pred_check
      _
    $region11: #{tpu_custom_call.1} parent=1 // pred_check_branch
      %38 = sbr.rel (0) target = $region13
    $region12: #{tpu_custom_call.1} parent=1 // pred_region
      _
    $region13: #{tpu_custom_call.1} parent=1 // pred_fallthru
      _
    // Predicated region
    $region14: #{tpu_custom_call.1} parent=1 // pred_check
      _
    $region15: #{tpu_custom_call.1} parent=1 // pred_check_branch
      %40 = sbr.rel (0) target = $region17
    $region16: #{tpu_custom_call.1} parent=1 // pred_region
      %42 = dma.done [#allocation3], 1024
    $region17: #{tpu_custom_call.1} parent=1 // pred_fallthru
      _
    // Predicated region
    $region18: #{tpu_custom_call.1} parent=1 // pred_check
      _
    $region19: #{tpu_custom_call.1} parent=1 // pred_check_branch
      %44 = sbr.rel (0) target = $region21
    $region20: #{tpu_custom_call.1} parent=1 // pred_region
      %46 = dma.done [#allocation6], 1024
    $region21: #{tpu_custom_call.1} parent=1 // pred_fallthru
      _
    %v47 = vld [vmem:[#allocation2] sm:$0xf]
    %v48 = vld [vmem:[#allocation2 + $0x4] sm:$0xf]
    %v49 = vld [vmem:[#allocation2 + $0x8] sm:$0xf]
    %v50 = vld [vmem:[#allocation2 + $0xc] sm:$0xf]
    %v51 = vld [vmem:[#allocation2 + $0x10] sm:$0xf]
    %v52 = vld [vmem:[#allocation2 + $0x14] sm:$0xf]
    %v53 = vld [vmem:[#allocation2 + $0x18] sm:$0xf]
    %v54 = vld [vmem:[#allocation2 + $0x1c] sm:$0xf]
    %v55 = vld [vmem:[#allocation2 + $0x20] sm:$0xf]
    %v56 = vld [vmem:[#allocation2 + $0x24] sm:$0xf]
    %v57 = vld [vmem:[#allocation2 + $0x28] sm:$0xf]
    %v58 = vld [vmem:[#allocation2 + $0x2c] sm:$0xf]
    %v59 = vld [vmem:[#allocation2 + $0x30] sm:$0xf]
    %v60 = vld [vmem:[#allocation2 + $0x34] sm:$0xf]
    %v61 = vld [vmem:[#allocation2 + $0x38] sm:$0xf]
    %v62 = vld [vmem:[#allocation2 + $0x3c] sm:$0xf]
    %v63 = vld [vmem:[#allocation5] sm:$0xf]
    %v64 = vld [vmem:[#allocation5 + $0x4] sm:$0xf]
    %v65 = vld [vmem:[#allocation5 + $0x8] sm:$0xf]
    %v66 = vld [vmem:[#allocation5 + $0xc] sm:$0xf]
    %v67 = vld [vmem:[#allocation5 + $0x10] sm:$0xf]
    %v68 = vld [vmem:[#allocation5 + $0x14] sm:$0xf]
    %v69 = vld [vmem:[#allocation5 + $0x18] sm:$0xf]
    %v70 = vld [vmem:[#allocation5 + $0x1c] sm:$0xf]
    %v71 = vld [vmem:[#allocation5 + $0x20] sm:$0xf]
    %v72 = vld [vmem:[#allocation5 + $0x24] sm:$0xf]
    %v73 = vld [vmem:[#allocation5 + $0x28] sm:$0xf]
    %v74 = vld [vmem:[#allocation5 + $0x2c] sm:$0xf]
    %v75 = vld [vmem:[#allocation5 + $0x30] sm:$0xf]
    %v76 = vld [vmem:[#allocation5 + $0x34] sm:$0xf]
    %v77 = vld [vmem:[#allocation5 + $0x38] sm:$0xf]
    %v78 = vld [vmem:[#allocation5 + $0x3c] sm:$0xf]
    %v79 = vld [vmem:[%s2] sm:$0x1]
    %v81 = vperm.slane %v79, 0
    %v99 = vunpack.c.l.b16 %v47
    %v100 = vunpack.c.l.b16 %v48
    %v101 = vunpack.c.l.b16 %v49
    %v102 = vunpack.c.l.b16 %v50
    %v103 = vunpack.c.l.b16 %v51
    %v104 = vunpack.c.l.b16 %v52
    %v105 = vunpack.c.l.b16 %v53
    %v106 = vunpack.c.l.b16 %v54
    %v107 = vunpack.c.l.b16 %v55
    %v108 = vunpack.c.l.b16 %v56
    %v109 = vunpack.c.l.b16 %v57
    %v110 = vunpack.c.l.b16 %v58
    %v111 = vunpack.c.l.b16 %v59
    %v112 = vunpack.c.l.b16 %v60
    %v113 = vunpack.c.l.b16 %v61
    %v114 = vunpack.c.l.b16 %v62
    %v115 = vpack.c.b16 %v100, %v99
    %v116 = vpack.c.b16 %v102, %v101
    %v117 = vpack.c.b16 %v104, %v103
    %v118 = vpack.c.b16 %v106, %v105
    %v119 = vpack.c.b16 %v108, %v107
    %v120 = vpack.c.b16 %v110, %v109
    %v121 = vpack.c.b16 %v112, %v111
    %v122 = vpack.c.b16 %v114, %v113
    %v147 = vunpack.c.l.b16 %v63
    %v148 = vunpack.c.l.b16 %v64
    %v149 = vunpack.c.l.b16 %v65
    %v150 = vunpack.c.l.b16 %v66
    %v151 = vunpack.c.l.b16 %v67
    %v152 = vunpack.c.l.b16 %v68
    %v153 = vunpack.c.l.b16 %v69
    %v154 = vunpack.c.l.b16 %v70
    %v155 = vunpack.c.l.b16 %v71
    %v156 = vunpack.c.l.b16 %v72
    %v157 = vunpack.c.l.b16 %v73
    %v158 = vunpack.c.l.b16 %v74
    %v159 = vunpack.c.l.b16 %v75
    %v160 = vunpack.c.l.b16 %v76
    %v161 = vunpack.c.l.b16 %v77
    %v162 = vunpack.c.l.b16 %v78
    %v163 = vpack.c.b16 %v148, %v147
    %v164 = vpack.c.b16 %v150, %v149
    %v165 = vpack.c.b16 %v152, %v151
    %v166 = vpack.c.b16 %v154, %v153
    %v167 = vpack.c.b16 %v156, %v155
    %v168 = vpack.c.b16 %v158, %v157
    %v169 = vpack.c.b16 %v160, %v159
    %v170 = vpack.c.b16 %v162, %v161
    %179 = vmatpush.bf16.msra.mxu0 %v170
    %180 = vmatpush.bf16.msra.mxu0 %v169
    %181 = vmatpush.bf16.msra.mxu0 %v168
    %182 = vmatpush.bf16.msra.mxu0 %v167
    %183 = vmatpush.bf16.msra.mxu0 %v166
    %184 = vmatpush.bf16.msra.mxu0 %v165
    %185 = vmatpush.bf16.msra.mxu0 %v164
    %186 = vmatpush.bf16.msra.mxu0 %v163
    %187 = vmatmul.bf16.gmra.mxu0 %v115
    %v188 = vpop.f32.mrf.mxu0
    %v189 = vadd.f32 %v81, %v188
    %v190 = vpop.f32.mrf.mxu0
    %v191 = vadd.f32 %v81, %v190
    %192 = vmatmul.bf16.gmra.mxu0 %v116
    %v193 = vpop.f32.mrf.mxu0
    %v194 = vadd.f32 %v81, %v193
    %v195 = vpop.f32.mrf.mxu0
    %v196 = vadd.f32 %v81, %v195
    %197 = vmatmul.bf16.gmra.mxu0 %v117
    %v198 = vpop.f32.mrf.mxu0
    %v199 = vadd.f32 %v81, %v198
    %v200 = vpop.f32.mrf.mxu0
    %v201 = vadd.f32 %v81, %v200
    %202 = vmatmul.bf16.gmra.mxu0 %v118
    %v203 = vpop.f32.mrf.mxu0
    %v204 = vadd.f32 %v81, %v203
    %v205 = vpop.f32.mrf.mxu0
    %v206 = vadd.f32 %v81, %v205
    %207 = vmatmul.bf16.gmra.mxu0 %v119
    %v208 = vpop.f32.mrf.mxu0
    %v209 = vadd.f32 %v81, %v208
    %v210 = vpop.f32.mrf.mxu0
    %v211 = vadd.f32 %v81, %v210
    %212 = vmatmul.bf16.gmra.mxu0 %v120
    %v213 = vpop.f32.mrf.mxu0
    %v214 = vadd.f32 %v81, %v213
    %v215 = vpop.f32.mrf.mxu0
    %v216 = vadd.f32 %v81, %v215
    %217 = vmatmul.bf16.gmra.mxu0 %v121
    %v218 = vpop.f32.mrf.mxu0
    %v219 = vadd.f32 %v81, %v218
    %v220 = vpop.f32.mrf.mxu0
    %v221 = vadd.f32 %v81, %v220
    %222 = vmatmul.bf16.gmra.mxu0 %v122
    %v223 = vpop.f32.mrf.mxu0
    %v224 = vadd.f32 %v81, %v223
    %v225 = vpop.f32.mrf.mxu0
    %v226 = vadd.f32 %v81, %v225
    %227 = vdwg.mxu0
    %v228 = vmax.f32 %v189, 0.0
    %v229 = vmax.f32 %v191, 0.0
    %v230 = vmax.f32 %v194, 0.0
    %v231 = vmax.f32 %v196, 0.0
    %v232 = vmax.f32 %v199, 0.0
    %v233 = vmax.f32 %v201, 0.0
    %v234 = vmax.f32 %v204, 0.0
    %v235 = vmax.f32 %v206, 0.0
    %v236 = vmax.f32 %v209, 0.0
    %v237 = vmax.f32 %v211, 0.0
    %v238 = vmax.f32 %v214, 0.0
    %v239 = vmax.f32 %v216, 0.0
    %v240 = vmax.f32 %v219, 0.0
    %v241 = vmax.f32 %v221, 0.0
    %v242 = vmax.f32 %v224, 0.0
    %v243 = vmax.f32 %v226, 0.0
    %v244 = vpack.c.bf16 %v228, %v228
    %v245 = vpack.c.bf16 %v229, %v229
    %v246 = vpack.c.bf16 %v230, %v230
    %v247 = vpack.c.bf16 %v231, %v231
    %v248 = vpack.c.bf16 %v232, %v232
    %v249 = vpack.c.bf16 %v233, %v233
    %v250 = vpack.c.bf16 %v234, %v234
    %v251 = vpack.c.bf16 %v235, %v235
    %v252 = vpack.c.bf16 %v236, %v236
    %v253 = vpack.c.bf16 %v237, %v237
    %v254 = vpack.c.bf16 %v238, %v238
    %v255 = vpack.c.bf16 %v239, %v239
    %v256 = vpack.c.bf16 %v240, %v240
    %v257 = vpack.c.bf16 %v241, %v241
    %v258 = vpack.c.bf16 %v242, %v242
    %v259 = vpack.c.bf16 %v243, %v243
    %260 = vst [vmem:[#allocation7] sm:$0xf] %v244
    %261 = vst [vmem:[#allocation7 + $0x4] sm:$0xf] %v245
    %262 = vst [vmem:[#allocation7 + $0x8] sm:$0xf] %v246
    %263 = vst [vmem:[#allocation7 + $0xc] sm:$0xf] %v247
    %264 = vst [vmem:[#allocation7 + $0x10] sm:$0xf] %v248
    %265 = vst [vmem:[#allocation7 + $0x14] sm:$0xf] %v249
    %266 = vst [vmem:[#allocation7 + $0x18] sm:$0xf] %v250
    %267 = vst [vmem:[#allocation7 + $0x1c] sm:$0xf] %v251
    %268 = vst [vmem:[#allocation7 + $0x20] sm:$0xf] %v252
    %269 = vst [vmem:[#allocation7 + $0x24] sm:$0xf] %v253
    %270 = vst [vmem:[#allocation7 + $0x28] sm:$0xf] %v254
    %271 = vst [vmem:[#allocation7 + $0x2c] sm:$0xf] %v255
    %272 = vst [vmem:[#allocation7 + $0x30] sm:$0xf] %v256
    %273 = vst [vmem:[#allocation7 + $0x34] sm:$0xf] %v257
    %274 = vst [vmem:[#allocation7 + $0x38] sm:$0xf] %v258
    %275 = vst [vmem:[#allocation7 + $0x3c] sm:$0xf] %v259
    // Predicated region
    $region22: #{tpu_custom_call.1} parent=1 // pred_check
      _
    $region23: #{tpu_custom_call.1} parent=1 // pred_check_branch
      %277 = sbr.rel (0) target = $region25
    $region24: #{tpu_custom_call.1} parent=1 // pred_region
      %279 = vsyncadd [#allocation4], 0
      %s280 = sshll.u32 [#allocation7], 4
      %s281 = int_to_ptr.vmem [resolvable:$true] %s280
      %s282 = sshll.u32 %s3, 4
      %s283 = int_to_ptr.hbm [resolvable:$true] %s282
      %288 = dma.vmem_to_hbm [thread:$0]  %s281, 1024, %s283, [#allocation4], 64, 64, 4
    $region25: #{tpu_custom_call.1} parent=1 // pred_fallthru
      _
    // Predicated region
    $region26: #{tpu_custom_call.1} parent=1 // pred_check
      _
    $region27: #{tpu_custom_call.1} parent=1 // pred_check_branch
      %290 = sbr.rel (0) target = $region29
    $region28: #{tpu_custom_call.1} parent=1 // pred_region
      %292 = dma.done [#allocation4], 1024
    $region29: #{tpu_custom_call.1} parent=1 // pred_fallthru
      _
    %293 = vsyncpa [#allocation3], 1
    %294 = vsyncpa [#allocation6], 1
    %295 = vsyncpa [#allocation4], 1

</llo_original>
